<compile_context>
chip_gen: v6e
topology: v6e:2x2x1
jax: 0.10.0
libtpu: 0.0.40
codegen_flags: <defaults>
</compile_context>

<pallas_src>
import jax
import jax.numpy as jnp
from jax.experimental import pallas as pl
from jax.experimental.pallas import tpu as pltpu


def linear_kernel(x_ref, w_ref, b_ref, o_ref):
    # x_ref: (TB, D) VMEM   w_ref: (1, D) VMEM   b_ref: (1,) SMEM   o_ref: (TB, 1)
    x = x_ref[...]
    w = w_ref[...]
    # VPU multiply + XLU lane reduce; no weight transpose, no N=1 MXU pass.
    y = jnp.sum(x.astype(jnp.float32) * w.astype(jnp.float32),
                axis=-1, keepdims=True)              # (TB, 1) f32
    o_ref[...] = (y + b_ref[0]).astype(o_ref.dtype)


def _choose_block_rows(b_rows, d, dtype_bytes=4,
                       x_double_buffer_budget=16 * 1024 * 1024):
    """Largest TB (multiple of 8, <=1024) whose double-buffered x tile fits budget."""
    tb = x_double_buffer_budget // (2 * d * dtype_bytes)
    tb = max(8, (tb // 8) * 8)
    tb = min(tb, 1024)
    b_pad8 = ((b_rows + 7) // 8) * 8
    return min(tb, b_pad8)


def linear_forward(x, weight, bias):
    """x: (..., D) f32, weight: (1, D) f32, bias: (1,) f32 -> (..., 1) f32."""
    orig_shape = x.shape
    D = orig_shape[-1]
    x2d = x.reshape(-1, D)
    B = x2d.shape[0]

    TB = _choose_block_rows(B, D)
    n_blocks = pl.cdiv(B, TB)
    B_pad = n_blocks * TB
    if B_pad != B:
        x2d = jnp.pad(x2d, ((0, B_pad - B), (0, 0)))

    # VMEM footprint: double-buffered x + out tiles, resident weight, headroom.
    dtype_bytes = jnp.dtype(x.dtype).itemsize
    vmem_need = (2 * (TB * D + TB) * dtype_bytes) + 2 * D * dtype_bytes + (2 << 20)
    vmem_limit = int(min(max(vmem_need, 16 << 20), 48 << 20))

    out = pl.pallas_call(
        linear_kernel,
        out_shape=jax.ShapeDtypeStruct((B_pad, 1), x.dtype),
        grid_spec=pltpu.PrefetchScalarGridSpec(
            num_scalar_prefetch=0,
            grid=(n_blocks,),
            in_specs=[
                pl.BlockSpec((TB, D), lambda i: (i, 0)),        # x tile
                pl.BlockSpec((1, D), lambda i: (0, 0)),         # weight, resident
                pl.BlockSpec(memory_space=pltpu.SMEM),          # bias scalar
            ],
            out_specs=pl.BlockSpec((TB, 1), lambda i: (i, 0)),
        ),
        compiler_params=pltpu.CompilerParams(
            dimension_semantics=("parallel",),
            vmem_limit_bytes=vmem_limit,
        ),
    )(x2d, weight, bias)

    out = out[:B]
    return out.reshape(orig_shape[:-1] + (1,))


if __name__ == "__main__":
    key = jax.random.PRNGKey(0)
    k_x, k_w, k_b = jax.random.split(key, 3)

    B, in_size = 8, 32  # small shapes consistent with the module

    # Deterministic parameter init mirroring PyTorch nn.Linear default:
    # U(-1/sqrt(in_size), 1/sqrt(in_size))
    bound = 1.0 / (in_size ** 0.5)
    weight = jax.random.uniform(k_w, (1, in_size), jnp.float32, -bound, bound)
    bias = jax.random.uniform(k_b, (1,), jnp.float32, -bound, bound)

    x = jax.random.normal(k_x, (B, in_size), jnp.float32)

    out = linear_forward(x, weight, bias)
    out = jax.block_until_ready(out)

    # Reference check in plain JAX
    ref = x @ weight.T + bias
    assert out.shape == (B, 1)
    assert jnp.allclose(out, ref, atol=1e-5, rtol=1e-5)

    print("KERNEL_OK")
</pallas_src>

<mosaic_0001>
module attributes {stable_mosaic.version = 11 : i64} {
  func.func @linear_kernel(%arg0: i32, %arg1: memref<8x32xf32, #tpu.memory_space<vmem>>, %arg2: memref<1x32xf32, #tpu.memory_space<vmem>>, %arg3: memref<1xf32, #tpu.memory_space<smem>>, %arg4: memref<8x1xf32, #tpu.memory_space<vmem>>) attributes {dimension_semantics = [#tpu.dimension_semantics<parallel>], iteration_bounds = array<i64: 1>, scalar_prefetch = 0 : i64, scratch_operands = 0 : i64, tpu.core_type = #tpu.core_type<tc>, window_params = [{transform_indices = @transform_0, window_bounds = array<i64: 8, 32>}, {pipeline_mode = #tpu.pipeline_mode<synchronous>, transform_indices = @transform_1, window_bounds = array<i64: 1, 32>}, {transform_indices = @transform_2, window_bounds = array<i64: 1>}, {transform_indices = @transform_3, window_bounds = array<i64: 8, 1>}]} {
    %c0 = arith.constant 0 : index
    %c0_0 = arith.constant 0 : index
    %0 = vector.load %arg1[%c0, %c0_0] : memref<8x32xf32, #tpu.memory_space<vmem>>, vector<8x32xf32>
    %c0_1 = arith.constant 0 : index
    %c0_2 = arith.constant 0 : index
    %1 = vector.load %arg2[%c0_1, %c0_2] : memref<1x32xf32, #tpu.memory_space<vmem>>, vector<1x32xf32>
    %2 = vector.broadcast %1 : vector<1x32xf32> to vector<8x32xf32>
    %3 = arith.mulf %0, %2 : vector<8x32xf32>
    %cst = arith.constant dense<0.000000e+00> : vector<8xf32>
    %4 = vector.multi_reduction <add>, %3, %cst [1] : vector<8x32xf32> to vector<8xf32>
    %5 = vector.shape_cast %4 : vector<8xf32> to vector<8x1xf32>
    %c0_3 = arith.constant 0 : index
    %6 = memref.load %arg3[%c0_3] : memref<1xf32, #tpu.memory_space<smem>>
    %7 = vector.broadcast %6 : f32 to vector<8x1xf32>
    %8 = arith.addf %5, %7 : vector<8x1xf32>
    %c0_4 = arith.constant 0 : index
    %c0_5 = arith.constant 0 : index
    %9 = vector.load %arg4[%c0_4, %c0_5] : memref<8x1xf32, #tpu.memory_space<vmem>>, vector<8x1xf32>
    tpu.vector_store %arg4[%c0_4, %c0_5], %8 {strides = array<i32>} : memref<8x1xf32, #tpu.memory_space<vmem>>, vector<8x1xf32>,
    return
  }
  func.func @transform_0(%arg0: i32) -> (i32, i32) {
    %c0_i32 = arith.constant 0 : i32
    %c0_i32_0 = arith.constant 0 : i32
    return %arg0, %c0_i32 : i32, i32
  }
  func.func @transform_1(%arg0: i32) -> (i32, i32) {
    %c0_i32 = arith.constant 0 : i32
    %c0_i32_0 = arith.constant 0 : i32
    %c0_i32_1 = arith.constant 0 : i32
    return %c0_i32, %c0_i32_0 : i32, i32
  }
  func.func @transform_2(%arg0: i32) -> i32 {
    %c0_i32 = arith.constant 0 : i32
    %c0_i32_0 = arith.constant 0 : i32
    return %c0_i32 : i32
  }
  func.func @transform_3(%arg0: i32) -> (i32, i32) {
    %c0_i32 = arith.constant 0 : i32
    %c0_i32_0 = arith.constant 0 : i32
    return %arg0, %c0_i32 : i32, i32
  }
}

</mosaic_0001>

<llo_original>
// kernel: tpu_custom_call.1
$region0: #{tpu_custom_call.1}
  #allocation0 [shape = 'u32[]', space=smem, size = 0x4, offset = 0x4, fixed_abs, tag = 'smem constant byte address 0x4 - core index']
  #allocation1 [shape = 'u32[144,128]{1,0:T(1,128)}', space=vmem, size = 0x12000, scoped, tag = 'internal scratch']
  #allocation2 [shape = 'f32[1]{0:T(128)S(6)}', space=smem, size = 0x200, scoped, tag = 'scoped memory for tpu_custom_call.1']
  %s0 = inlined_call_operand.hbm [shape: f32[8,32], index: 0, kind: input, shape index: {}]
  %s1 = inlined_call_operand.vmem [shape: f32[1,32], index: 1, kind: input, shape index: {}]
  %s2 = inlined_call_operand.<no memory space> [shape: f32[1], index: 2, kind: input, shape index: {}]
  %s3 = inlined_call_operand.vmem [shape: f32[8,1], index: 3, kind: output, shape index: {}]
  %s4 = sld [smem:[#allocation0]]
  $region26: #{tpu_custom_call.1} parent=0
    _
  %s6 = ssub.s32 1, %s4
  %s7 = scalar_select 0, %s6, %s4
  %8 = sst [smem:[#allocation2]] %s2
  $region1: #{tpu_custom_call.1} parent=0
    #allocation3 [shape = 'u8[4096]{0}', space=vmem, size = 0x1000, scoped, tag = 'input window, operand 0, single buffered']
    #allocation4 [shape = 's32[1]{0}', space=sflag, size = 0x4, scoped, tag = 'scoped memory for tpu_custom_call.1']
    %9 = vsyncpa [#allocation4], 0
    // Predicated region
    $region2: #{tpu_custom_call.1} parent=1 // pred_check
      _
    $region3: #{tpu_custom_call.1} parent=1 // pred_check_branch
      %11 = sbr.rel (0) target = $region5
    $region4: #{tpu_custom_call.1} parent=1 // pred_region
      %s13 = ssub.s32 128, 128
      %14 = vsyncadd [#allocation4], %s13
      %s16 = sshll.u32 [#allocation3], 4
      %s17 = int_to_ptr.vmem [resolvable:$true] %s16
      %19 = dma.hbm_to_vmem [thread:$0]  %s0, 128, %s17, [#allocation4]
    $region5: #{tpu_custom_call.1} parent=1 // pred_fallthru
      _
    // Predicated region
    $region6: #{tpu_custom_call.1} parent=1 // pred_check
      _
    $region7: #{tpu_custom_call.1} parent=1 // pred_check_branch
      %21 = sbr.rel (0) target = $region9
    $region8: #{tpu_custom_call.1} parent=1 // pred_region
      _
    $region9: #{tpu_custom_call.1} parent=1 // pred_fallthru
      _
    // Predicated region
    $region10: #{tpu_custom_call.1} parent=1 // pred_check
      _
    $region11: #{tpu_custom_call.1} parent=1 // pred_check_branch
      %23 = sbr.rel (0) target = $region13
    $region12: #{tpu_custom_call.1} parent=1 // pred_region
      _
    $region13: #{tpu_custom_call.1} parent=1 // pred_fallthru
      _
    // Predicated region
    $region14: #{tpu_custom_call.1} parent=1 // pred_check
      _
    $region15: #{tpu_custom_call.1} parent=1 // pred_check_branch
      %25 = sbr.rel (0) target = $region17
    $region16: #{tpu_custom_call.1} parent=1 // pred_region
      %26 = dma.done [#allocation4], 128
    $region17: #{tpu_custom_call.1} parent=1 // pred_fallthru
      _
    %v27 = vld [vmem:[#allocation3] sm:$0xff]
    %v28 = vld [vmem:[%s1] sm:$0x1]
    %v30 = vlaneseq
    %v31 = vshrl.u32 %v30, 7
    %v32 = vsub.s32 0, %v31
    %v33 = vrot.slane %v28, %v32
    %v35 = vmul.f32 %v27, %v33
    %vm36 = vcmask 261120
    %v37 = vsel %vm36, %v35, 0.0
    %38 = vadd.xlane.f32.xlu0 %v37
    %v39 = vpop.xlane.xlu0 %38
    %s40 = sld [smem:[#allocation2]]
    %v41 = vstv %s40
    %v42 = vadd.f32 %v39, %v41
    %vm43 = vcmask 7168
    %44 = vst.msk [vmem:[%s3] sm:$0xff] %vm43, %v42
    // Predicated region
    $region18: #{tpu_custom_call.1} parent=1 // pred_check
      _
    $region19: #{tpu_custom_call.1} parent=1 // pred_check_branch
      %46 = sbr.rel (0) target = $region21
    $region20: #{tpu_custom_call.1} parent=1 // pred_region
      _
    $region21: #{tpu_custom_call.1} parent=1 // pred_fallthru
      _
    // Predicated region
    $region22: #{tpu_custom_call.1} parent=1 // pred_check
      _
    $region23: #{tpu_custom_call.1} parent=1 // pred_check_branch
      %48 = sbr.rel (0) target = $region25
    $region24: #{tpu_custom_call.1} parent=1 // pred_region
      _
    $region25: #{tpu_custom_call.1} parent=1 // pred_fallthru
      _
    %49 = vsyncpa [#allocation4], 1

</llo_original>
